<compile_context>
chip_gen: v6e
topology: v6e:2x2x1
jax: 0.10.0
libtpu: 0.0.40
codegen_flags: <defaults>
</compile_context>

<pallas_src>
import functools

import jax
import jax.numpy as jnp
from jax.experimental import pallas as pl
from jax.experimental.pallas import tpu as pltpu

_NEG = -1e30  # finite "minus infinity": keeps exp()/max() NaN-free on padded columns


def _cosface_kernel(logits_ref, labels_ref, out_ref, m_scr, l_scr, t_scr,
                    *, s: float, m: float, num_classes: int):
    k = pl.program_id(1)                          # class-tile index (reduction axis)

    @pl.when(k == 0)
    def _init():
        m_scr[...] = jnp.full_like(m_scr, _NEG)
        l_scr[...] = jnp.zeros_like(l_scr)
        t_scr[...] = jnp.zeros_like(t_scr)

    tb, tc = logits_ref.shape
    logits = logits_ref[...].astype(jnp.float32)            # (TB, TC)
    labels = labels_ref[...]                                  # (TB, 1) int32

    # (1, TC) global class ids for this tile; compares broadcast against labels.
    class_ids = jax.lax.broadcasted_iota(jnp.int32, (1, tc), 1) + k * tc
    valid = class_ids < num_classes                           # (1, TC)  pad-column mask
    is_target = class_ids == labels                           # (TB, TC) one hit per row

    # scaled = (logits - m*onehot) * s, without materializing a f32 onehot.
    scaled = logits * s
    scaled = jnp.where(is_target, scaled - jnp.float32(s * m), scaled)
    # Mask padded / out-of-bounds class columns AFTER the margin (overwrites any
    # garbage read past C on the partial last tile).
    scaled = jnp.where(valid, scaled, _NEG)

    # Online logsumexp update.
    m_prev = m_scr[...]
    m_new = jnp.maximum(m_prev, jnp.max(scaled, axis=-1, keepdims=True))
    alpha = jnp.exp(m_prev - m_new)
    p = jnp.exp(scaled - m_new)
    l_scr[...] = alpha * l_scr[...] + jnp.sum(p, axis=-1, keepdims=True)
    m_scr[...] = m_new

    # Target logit accumulator (each label falls in exactly one class tile).
    t_scr[...] += jnp.sum(jnp.where(is_target, scaled, 0.0), axis=-1, keepdims=True)

    @pl.when(k == pl.num_programs(1) - 1)
    def _finalize():
        # per-row CE: logsumexp(scaled) - scaled[target]
        out_ref[...] = m_scr[...] + jnp.log(l_scr[...]) - t_scr[...]


def _round_up(x: int, n: int) -> int:
    return ((x + n - 1) // n) * n


def cosface_loss(logits, norms, labels, *, s: float = 64.0, m: float = 0.4,
                 block_b: int = 128, block_c: int = 8192):
    """Pallas CosFace loss. `norms` is unused (parity with the PyTorch module).

    Pass bf16 `logits` to halve HBM traffic (kernel accumulates in f32).
    block_b/block_c are tunable per generation: defaults give a 4 MiB f32 tile
    (8 MiB double-buffered) — safe for v7x's 64 MiB VMEM; v5e/v6e (128 MiB) can
    raise block_c to ~16384.
    """
    del norms
    B, C = logits.shape

    tb = min(_round_up(block_b, 8), _round_up(B, 8))
    # Ensure >=2 batch tiles when the batch allows it so both v7x TensorCores work.
    if B > 8:
        tb = min(tb, _round_up(-(-B // 2), 8))
    tc = min(_round_up(block_c, 128), _round_up(C, 128))

    labels2d = labels.astype(jnp.int32).reshape(B, 1)

    kernel = functools.partial(_cosface_kernel, s=float(s), m=float(m),
                               num_classes=C)

    per_row = pl.pallas_call(
        kernel,
        out_shape=jax.ShapeDtypeStruct((B, 1), jnp.float32),
        grid_spec=pltpu.PrefetchScalarGridSpec(
            num_scalar_prefetch=0,
            grid=(pl.cdiv(B, tb), pl.cdiv(C, tc)),   # (batch, class-reduction)
            in_specs=[
                pl.BlockSpec((tb, tc), lambda i, k: (i, k)),   # logits
                pl.BlockSpec((tb, 1), lambda i, k: (i, 0)),    # labels
            ],
            out_specs=pl.BlockSpec((tb, 1), lambda i, k: (i, 0)),
            scratch_shapes=[
                pltpu.VMEM((tb, 1), jnp.float32),   # running max
                pltpu.VMEM((tb, 1), jnp.float32),   # running sum
                pltpu.VMEM((tb, 1), jnp.float32),   # target logit
            ],
        ),
        compiler_params=pltpu.CompilerParams(
            dimension_semantics=("parallel", "arbitrary"),
            vmem_limit_bytes=48 * 1024 * 1024,
        ),
        cost_estimate=pl.CostEstimate(
            flops=10 * B * C,
            transcendentals=B * C,
            bytes_accessed=B * C * logits.dtype.itemsize + 4 * B + 4 * B,
        ),
    )(logits, labels2d)

    # Mean over the real batch (rows from a partial last batch tile are discarded).
    return jnp.mean(per_row[:B, 0])


def _reference_loss(logits, labels, *, s=64.0, m=0.4):
    onehot = jax.nn.one_hot(labels, logits.shape[1], dtype=jnp.float32)
    scaled = (logits.astype(jnp.float32) - m * onehot) * s
    logz = jax.nn.logsumexp(scaled, axis=-1)
    tgt = jnp.take_along_axis(scaled, labels[:, None], axis=-1)[:, 0]
    return jnp.mean(logz - tgt)


if __name__ == "__main__":
    key = jax.random.PRNGKey(0)
    k1, k2, k3 = jax.random.split(key, 3)

    # Small shapes that still exercise the partial batch tile (B=6 with tb=8), the
    # partial class tile (C=1000 with tc=256) and the multi-tile online logsumexp.
    B, C = 6, 1000
    logits = jax.random.normal(k1, (B, C), dtype=jnp.float32)
    norms = jax.random.uniform(k2, (B, 1), dtype=jnp.float32) + 0.5  # unused
    labels = jax.random.randint(k3, (B,), 0, C, dtype=jnp.int32)

    ref = _reference_loss(logits, labels, s=64.0, m=0.4)

    # Multi-class-tile path (grid (1, 4)).
    loss = jax.block_until_ready(
        cosface_loss(logits, norms, labels, s=64.0, m=0.4, block_b=8, block_c=256))
    assert jnp.allclose(loss, ref, rtol=1e-4, atol=1e-4), (loss, ref)

    # Default tiling path (single tile in both axes for these shapes).
    loss2 = jax.block_until_ready(cosface_loss(logits, norms, labels))
    assert jnp.allclose(loss2, ref, rtol=1e-4, atol=1e-4), (loss2, ref)

    # bf16 HBM-side logits path (kernel upcasts and accumulates in f32).
    logits_bf16 = logits.astype(jnp.bfloat16)
    ref_bf16 = _reference_loss(logits_bf16.astype(jnp.float32), labels, s=64.0, m=0.4)
    loss3 = jax.block_until_ready(cosface_loss(logits_bf16, norms, labels))
    assert jnp.allclose(loss3, ref_bf16, rtol=1e-3, atol=1e-3), (loss3, ref_bf16)

    print("KERNEL_OK")
</pallas_src>

<mosaic_0001>
module attributes {stable_mosaic.version = 11 : i64} {
  func.func @_cosface_kernel(%arg0: i32, %arg1: i32, %arg2: memref<8x256xf32, #tpu.memory_space<vmem>>, %arg3: memref<8x1xi32, #tpu.memory_space<vmem>>, %arg4: memref<8x1xf32, #tpu.memory_space<vmem>>, %arg5: memref<8x1xf32, #tpu.memory_space<vmem>>, %arg6: memref<8x1xf32, #tpu.memory_space<vmem>>, %arg7: memref<8x1xf32, #tpu.memory_space<vmem>>) attributes {dimension_semantics = [#tpu.dimension_semantics<parallel>, #tpu.dimension_semantics<arbitrary>], iteration_bounds = array<i64: 1, 4>, scalar_prefetch = 0 : i64, scratch_operands = 3 : i64, tpu.core_type = #tpu.core_type<tc>, window_params = [{transform_indices = @transform_0, window_bounds = array<i64: 8, 256>}, {transform_indices = @transform_1, window_bounds = array<i64: 8, 1>}, {transform_indices = @transform_2, window_bounds = array<i64: 8, 1>}]} {
    %c0_i32 = arith.constant 0 : i32
    %0 = arith.cmpi eq, %arg1, %c0_i32 : i32
    %1 = arith.extui %0 : i1 to i32
    %c0_i32_0 = arith.constant 0 : i32
    %2 = arith.cmpi ne, %1, %c0_i32_0 : i32
    scf.if %2 {
      %cst_23 = arith.constant -1.000000e+30 : f32
      %49 = vector.broadcast %cst_23 : f32 to vector<8x1xf32>
      %c0_24 = arith.constant 0 : index
      %c0_25 = arith.constant 0 : index
      %50 = vector.load %arg5[%c0_24, %c0_25] : memref<8x1xf32, #tpu.memory_space<vmem>>, vector<8x1xf32>
      tpu.vector_store %arg5[%c0_24, %c0_25], %49 {strides = array<i32>} : memref<8x1xf32, #tpu.memory_space<vmem>>, vector<8x1xf32>,
      %cst_26 = arith.constant 0.000000e+00 : f32
      %51 = vector.broadcast %cst_26 : f32 to vector<8x1xf32>
      %c0_27 = arith.constant 0 : index
      %c0_28 = arith.constant 0 : index
      %52 = vector.load %arg6[%c0_27, %c0_28] : memref<8x1xf32, #tpu.memory_space<vmem>>, vector<8x1xf32>
      tpu.vector_store %arg6[%c0_27, %c0_28], %51 {strides = array<i32>} : memref<8x1xf32, #tpu.memory_space<vmem>>, vector<8x1xf32>,
      %cst_29 = arith.constant 0.000000e+00 : f32
      %53 = vector.broadcast %cst_29 : f32 to vector<8x1xf32>
      %c0_30 = arith.constant 0 : index
      %c0_31 = arith.constant 0 : index
      %54 = vector.load %arg7[%c0_30, %c0_31] : memref<8x1xf32, #tpu.memory_space<vmem>>, vector<8x1xf32>
      tpu.vector_store %arg7[%c0_30, %c0_31], %53 {strides = array<i32>} : memref<8x1xf32, #tpu.memory_space<vmem>>, vector<8x1xf32>,
    } else {
    }
    %c0 = arith.constant 0 : index
    %c0_1 = arith.constant 0 : index
    %3 = vector.load %arg2[%c0, %c0_1] : memref<8x256xf32, #tpu.memory_space<vmem>>, vector<8x256xf32>
    %c0_2 = arith.constant 0 : index
    %c0_3 = arith.constant 0 : index
    %4 = vector.load %arg3[%c0_2, %c0_3] : memref<8x1xi32, #tpu.memory_space<vmem>>, vector<8x1xi32>
    %5 = tpu.iota {dimensions = array<i32: 1>} : vector<1x256xi32>
    %c256_i32 = arith.constant 256 : i32
    %6 = arith.muli %arg1, %c256_i32 : i32
    %7 = vector.broadcast %6 : i32 to vector<1x256xi32>
    %8 = arith.addi %5, %7 : vector<1x256xi32>
    %c1000_i32 = arith.constant 1000 : i32
    %9 = vector.broadcast %c1000_i32 : i32 to vector<1x256xi32>
    %10 = arith.cmpi slt, %8, %9 : vector<1x256xi32>
    %11 = vector.broadcast %8 : vector<1x256xi32> to vector<8x256xi32>
    %12 = vector.broadcast %4 : vector<8x1xi32> to vector<8x256xi32>
    %13 = arith.cmpi eq, %11, %12 : vector<8x256xi32>
    %cst = arith.constant 6.400000e+01 : f32
    %14 = vector.broadcast %cst : f32 to vector<8x256xf32>
    %15 = arith.mulf %3, %14 : vector<8x256xf32>
    %cst_4 = arith.constant 2.560000e+01 : f32
    %16 = vector.broadcast %cst_4 : f32 to vector<8x256xf32>
    %17 = arith.subf %15, %16 : vector<8x256xf32>
    %18 = arith.select %13, %17, %15 : vector<8x256xi1>, vector<8x256xf32>
    %cst_5 = arith.constant -1.000000e+30 : f32
    %19 = vector.shape_cast %10 : vector<1x256xi1> to vector<1x256xi1>
    %20 = vector.broadcast %19 : vector<1x256xi1> to vector<8x256xi1>
    %21 = vector.broadcast %cst_5 : f32 to vector<8x256xf32>
    %22 = arith.select %20, %18, %21 : vector<8x256xi1>, vector<8x256xf32>
    %c0_6 = arith.constant 0 : index
    %c0_7 = arith.constant 0 : index
    %23 = vector.load %arg5[%c0_6, %c0_7] : memref<8x1xf32, #tpu.memory_space<vmem>>, vector<8x1xf32>
    %cst_8 = arith.constant dense<0xFF800000> : vector<8xf32>
    %24 = vector.multi_reduction <maximumf>, %22, %cst_8 [1] : vector<8x256xf32> to vector<8xf32>
    %25 = vector.shape_cast %24 : vector<8xf32> to vector<8x1xf32>
    %26 = arith.maximumf %23, %25 : vector<8x1xf32>
    %27 = arith.subf %23, %26 : vector<8x1xf32>
    %28 = math.exp %27 : vector<8x1xf32>
    %29 = vector.broadcast %26 : vector<8x1xf32> to vector<8x256xf32>
    %30 = arith.subf %22, %29 : vector<8x256xf32>
    %31 = math.exp %30 : vector<8x256xf32>
    %c0_9 = arith.constant 0 : index
    %c0_10 = arith.constant 0 : index
    %32 = vector.load %arg6[%c0_9, %c0_10] : memref<8x1xf32, #tpu.memory_space<vmem>>, vector<8x1xf32>
    %33 = arith.mulf %28, %32 : vector<8x1xf32>
    %cst_11 = arith.constant dense<0.000000e+00> : vector<8xf32>
    %34 = vector.multi_reduction <add>, %31, %cst_11 [1] : vector<8x256xf32> to vector<8xf32>
    %35 = vector.shape_cast %34 : vector<8xf32> to vector<8x1xf32>
    %36 = arith.addf %33, %35 : vector<8x1xf32>
    %c0_12 = arith.constant 0 : index
    %c0_13 = arith.constant 0 : index
    %37 = vector.load %arg6[%c0_12, %c0_13] : memref<8x1xf32, #tpu.memory_space<vmem>>, vector<8x1xf32>
    tpu.vector_store %arg6[%c0_12, %c0_13], %36 {strides = array<i32>} : memref<8x1xf32, #tpu.memory_space<vmem>>, vector<8x1xf32>,
    %c0_14 = arith.constant 0 : index
    %c0_15 = arith.constant 0 : index
    %38 = vector.load %arg5[%c0_14, %c0_15] : memref<8x1xf32, #tpu.memory_space<vmem>>, vector<8x1xf32>
    tpu.vector_store %arg5[%c0_14, %c0_15], %26 {strides = array<i32>} : memref<8x1xf32, #tpu.memory_space<vmem>>, vector<8x1xf32>,
    %c0_16 = arith.constant 0 : index
    %c0_17 = arith.constant 0 : index
    %39 = vector.load %arg7[%c0_16, %c0_17] : memref<8x1xf32, #tpu.memory_space<vmem>>, vector<8x1xf32>
    %cst_18 = arith.constant 0.000000e+00 : f32
    %40 = vector.broadcast %cst_18 : f32 to vector<8x256xf32>
    %41 = arith.select %13, %22, %40 : vector<8x256xi1>, vector<8x256xf32>
    %cst_19 = arith.constant dense<0.000000e+00> : vector<8xf32>
    %42 = vector.multi_reduction <add>, %41, %cst_19 [1] : vector<8x256xf32> to vector<8xf32>
    %43 = vector.shape_cast %42 : vector<8xf32> to vector<8x1xf32>
    %44 = arith.addf %39, %43 : vector<8x1xf32>
    %c0_20 = arith.constant 0 : index
    %c0_21 = arith.constant 0 : index
    %45 = vector.load %arg7[%c0_20, %c0_21] : memref<8x1xf32, #tpu.memory_space<vmem>>, vector<8x1xf32>
    tpu.vector_store %arg7[%c0_20, %c0_21], %44 {strides = array<i32>} : memref<8x1xf32, #tpu.memory_space<vmem>>, vector<8x1xf32>,
    %c3_i32 = arith.constant 3 : i32
    %46 = arith.cmpi eq, %arg1, %c3_i32 : i32
    %47 = arith.extui %46 : i1 to i32
    %c0_i32_22 = arith.constant 0 : i32
    %48 = arith.cmpi ne, %47, %c0_i32_22 : i32
    scf.if %48 {
      %c0_23 = arith.constant 0 : index
      %c0_24 = arith.constant 0 : index
      %49 = vector.load %arg5[%c0_23, %c0_24] : memref<8x1xf32, #tpu.memory_space<vmem>>, vector<8x1xf32>
      %c0_25 = arith.constant 0 : index
      %c0_26 = arith.constant 0 : index
      %50 = vector.load %arg6[%c0_25, %c0_26] : memref<8x1xf32, #tpu.memory_space<vmem>>, vector<8x1xf32>
      %51 = math.log %50 : vector<8x1xf32>
      %52 = arith.addf %49, %51 : vector<8x1xf32>
      %c0_27 = arith.constant 0 : index
      %c0_28 = arith.constant 0 : index
      %53 = vector.load %arg7[%c0_27, %c0_28] : memref<8x1xf32, #tpu.memory_space<vmem>>, vector<8x1xf32>
      %54 = arith.subf %52, %53 : vector<8x1xf32>
      %c0_29 = arith.constant 0 : index
      %c0_30 = arith.constant 0 : index
      %55 = vector.load %arg4[%c0_29, %c0_30] : memref<8x1xf32, #tpu.memory_space<vmem>>, vector<8x1xf32>
      tpu.vector_store %arg4[%c0_29, %c0_30], %54 {strides = array<i32>} : memref<8x1xf32, #tpu.memory_space<vmem>>, vector<8x1xf32>,
    } else {
    }
    return
  }
  func.func @transform_0(%arg0: i32, %arg1: i32) -> (i32, i32) {
    %c0_i32 = arith.constant 0 : i32
    return %arg0, %arg1 : i32, i32
  }
  func.func @transform_1(%arg0: i32, %arg1: i32) -> (i32, i32) {
    %c0_i32 = arith.constant 0 : i32
    %c0_i32_0 = arith.constant 0 : i32
    return %arg0, %c0_i32 : i32, i32
  }
  func.func @transform_2(%arg0: i32, %arg1: i32) -> (i32, i32) {
    %c0_i32 = arith.constant 0 : i32
    %c0_i32_0 = arith.constant 0 : i32
    return %arg0, %c0_i32 : i32, i32
  }
}

</mosaic_0001>

<llo_original>
// kernel: tpu_custom_call.1
$region0: #{tpu_custom_call.1}
  #allocation0 [shape = 'u32[]', space=smem, size = 0x4, offset = 0x4, fixed_abs, tag = 'smem constant byte address 0x4 - core index']
  #allocation1 [shape = 'u32[144,128]{1,0:T(1,128)}', space=vmem, size = 0x12000, scoped, tag = 'internal scratch']
  #allocation2 [shape = 'f32[8,1]{1,0:T(8,128)}', space=vmem, size = 0x1000, scoped, tag = 'scratch operand']
  #allocation3 [shape = 'f32[8,1]{1,0:T(8,128)}', space=vmem, size = 0x1000, scoped, tag = 'scratch operand']
  #allocation4 [shape = 'f32[8,1]{1,0:T(8,128)}', space=vmem, size = 0x1000, scoped, tag = 'scratch operand']
  %s0 = inlined_call_operand.hbm [shape: f32[6,1000], index: 0, kind: input, shape index: {}]
  %s1 = inlined_call_operand.vmem [shape: s32[6,1], index: 1, kind: input, shape index: {}]
  %s2 = inlined_call_operand.vmem [shape: f32[6,1], index: 2, kind: output, shape index: {}]
  %s3 = sld [smem:[#allocation0]]
  $region53: #{tpu_custom_call.1} parent=0
    _
  %s5 = ssub.s32 1, %s3
  %s6 = scalar_select 0, %s5, %s3
  $region1: #{tpu_custom_call.1} parent=0
    #allocation5 [shape = 'u8[16384]{0}', space=vmem, size = 0x4000, scoped, tag = 'input window, operand 0']
    #allocation6 [shape = 's32[2]{0}', space=sflag, size = 0x8, scoped, tag = 'scoped memory for tpu_custom_call.1']
    %7 = vsyncpa [#allocation6], 0
    %s8 = scalar_lea.sflag [#allocation6], 1
    %9 = vsyncpa %s8, 0
    loop: start=0, step=1, limit=6
    $region2: #{tpu_custom_call.1} parent=1 // loop_pre_header
      _
    $region3: #{tpu_custom_call.1} parent=1 // loop_header
      %s11 = sphi 0, %s15
      %p12 = scmp.ge.s32.totalorder %s11, 6
      %s18 = sphi 0, %s30
      %s19 = sphi 0, %s26
      %s20 = sphi 0, %s18
      %s21 = sphi 0, %s19
      %s22 = sphi 0, %s20
      %s23 = sphi 0, %s21
      %s35 = sphi 0, %s37
      %s38 = sphi 0, %s35
      %s39 = sphi 0, %s38
      %s55 = sphi 0, %s39
      %s61 = sphi 0, %s63
      %s64 = sphi 0, %s61
      %s65 = sphi 0, %s64
      %s81 = sphi 0, %s65
      %s87 = sphi 0, %s89
      %s90 = sphi 0, %s87
      %s91 = sphi 0, %s90
      %s107 = sphi 0, %s91
    $region4: #{tpu_custom_call.1} parent=1 // loop_header_branch
      %14 = sbr.rel (%p12) target = $region8
    $region5: #{tpu_custom_call.1} parent=1 // loop_body
      %s16 = ssub.s32 %s11, 1
      %s17 = ssub.s32 %s11, 2
      %s24 = sadd.s32 1, %s19
      %p25 = scmp.ge.s32.totalorder %s24, 4
      %s26 = scalar_select %p25, 0, %s24
      %s27 = sadd.s32 1, %s18
      %s28 = scalar_select %p25, %s27, %s18
      %p29 = scmp.ge.s32.totalorder %s28, 1
      %s30 = scalar_select %p29, 0, %s28
      %s31 = ssub.s32 %s18, %s30
      %s32 = ssub.s32 %s19, %s26
      %s33 = sor.u32 %s31, %s32
      %p34 = scmp.eq.s32.totalorder %s33, 0
      %s36 = sadd.s32 %s35, 1
      %s37 = scalar_select %p34, %s35, %s36
      %p40 = pneg %p34
      %p41 = scmp.eq.s32.totalorder %s11, 3
      %p42 = por %p40, %p41
      %p43 = scmp.ne.s32.totalorder %s35, %s38
      %p44 = scmp.eq.s32.totalorder %s11, 0
      %p45 = por %p43, %p44
      %p46 = scmp.ne.s32.totalorder %s35, %s38
      %p47 = scmp.eq.s32.totalorder %s16, 3
      %p48 = por %p46, %p47
      %p49 = scmp.ne.s32.totalorder %s38, %s39
      %p50 = scmp.eq.s32.totalorder %s16, 0
      %p51 = por %p49, %p50
      %p52 = scmp.ne.s32.totalorder %s38, %s39
      %p53 = scmp.eq.s32.totalorder %s17, 3
      %p54 = por %p52, %p53
      %p56 = scmp.ne.s32.totalorder %s39, %s55
      %p57 = scmp.eq.s32.totalorder %s17, 0
      %p58 = por %p56, %p57
      %s59 = ssub.s32 %s18, %s30
      %p60 = scmp.eq.s32.totalorder %s59, 0
      %s62 = sadd.s32 %s61, 1
      %s63 = scalar_select %p60, %s61, %s62
      %p66 = pneg %p60
      %p67 = scmp.eq.s32.totalorder %s11, 3
      %p68 = por %p66, %p67
      %p69 = scmp.ne.s32.totalorder %s61, %s64
      %p70 = scmp.eq.s32.totalorder %s11, 0
      %p71 = por %p69, %p70
      %p72 = scmp.ne.s32.totalorder %s61, %s64
      %p73 = scmp.eq.s32.totalorder %s16, 3
      %p74 = por %p72, %p73
      %p75 = scmp.ne.s32.totalorder %s64, %s65
      %p76 = scmp.eq.s32.totalorder %s16, 0
      %p77 = por %p75, %p76
      %p78 = scmp.ne.s32.totalorder %s64, %s65
      %p79 = scmp.eq.s32.totalorder %s17, 3
      %p80 = por %p78, %p79
      %p82 = scmp.ne.s32.totalorder %s65, %s81
      %p83 = scmp.eq.s32.totalorder %s17, 0
      %p84 = por %p82, %p83
      %s85 = ssub.s32 %s18, %s30
      %p86 = scmp.eq.s32.totalorder %s85, 0
      %s88 = sadd.s32 %s87, 1
      %s89 = scalar_select %p86, %s87, %s88
      %p92 = pneg %p86
      %p93 = scmp.eq.s32.totalorder %s11, 3
      %p94 = por %p92, %p93
      %p95 = scmp.ne.s32.totalorder %s87, %s90
      %p96 = scmp.eq.s32.totalorder %s11, 0
      %p97 = por %p95, %p96
      %p98 = scmp.ne.s32.totalorder %s87, %s90
      %p99 = scmp.eq.s32.totalorder %s16, 3
      %p100 = por %p98, %p99
      %p101 = scmp.ne.s32.totalorder %s90, %s91
      %p102 = scmp.eq.s32.totalorder %s16, 0
      %p103 = por %p101, %p102
      %p104 = scmp.ne.s32.totalorder %s90, %s91
      %p105 = scmp.eq.s32.totalorder %s17, 3
      %p106 = por %p104, %p105
      %p108 = scmp.ne.s32.totalorder %s91, %s107
      %p109 = scmp.eq.s32.totalorder %s17, 0
      %p110 = por %p108, %p109
      %p111 = scmp.le.s32.totalorder 1, %s11
      %p112 = scmp.lt.s32.totalorder %s11, 5
      %p113 = pnand %p111, %p112
      %p114 = pneg %p113
      // Predicated region
      $region9: #{tpu_custom_call.1} parent=5 // pred_check
        _
      $region10: #{tpu_custom_call.1} parent=5 // pred_check_branch
        %116 = sbr.rel (%p113) target = $region12
      $region11: #{tpu_custom_call.1} parent=5 // pred_region
        %s117 = ssub.s32 %s11, 1
        // Predicated region
        $region13: #{tpu_custom_call.1} parent=11 // pred_check
          %p118 = pneg %p77
        $region14: #{tpu_custom_call.1} parent=11 // pred_check_branch
          %120 = sbr.rel (%p118) target = $region16
        $region15: #{tpu_custom_call.1} parent=11 // pred_region
          %p121 = scmp.lt.s32.totalorder %s20, 0
          %s122 = scalar_select %p121, %s20, 0
          %s123 = smul.addr %s122, 8
          %s124 = scalar_lea.vmem %s1, %s123
        $region16: #{tpu_custom_call.1} parent=11 // pred_fallthru
          _
      $region12: #{tpu_custom_call.1} parent=5 // pred_fallthru
        _
      %p125 = scmp.lt.s32.totalorder %s11, 4
      // Predicated region
      $region17: #{tpu_custom_call.1} parent=5 // pred_check
        %p126 = pneg %p125
      $region18: #{tpu_custom_call.1} parent=5 // pred_check_branch
        %128 = sbr.rel (%p126) target = $region20
      $region19: #{tpu_custom_call.1} parent=5 // pred_region
        // Predicated region
        $region21: #{tpu_custom_call.1} parent=19 // pred_check
          %p129 = pneg %p45
        $region22: #{tpu_custom_call.1} parent=19 // pred_check_branch
          %131 = sbr.rel (%p129) target = $region24
        $region23: #{tpu_custom_call.1} parent=19 // pred_region
          %s132 = sand.u32 %s35, 1
          %s133 = scalar_lea.sflag [#allocation6], %s132
          %s134 = sand.u32 %s35, 1
          %s135 = smul.addr %s134, 16
          %s136 = scalar_lea.vmem [#allocation5], %s135
          %s137 = smul.u32 2, %s19
          %s139 = ssub.s32 256, 256
          %140 = vsyncadd %s133, %s139
          %s141 = smul.addr %s18, 8
          %s142 = sadd.s32 %s137, %s141
          %s143 = smul.addr %s142, 128
          %s144 = scalar_lea.hbm %s0, %s143
          %s146 = sshll.u32 %s136, 4
          %s147 = int_to_ptr.vmem [resolvable:$true] %s146
          %149 = dma.hbm_to_vmem [thread:$0]  %s144, 256, %s147, %s133
        $region24: #{tpu_custom_call.1} parent=19 // pred_fallthru
          _
      $region20: #{tpu_custom_call.1} parent=5 // pred_fallthru
        _
      %p150 = scmp.le.s32.totalorder 1, %s11
      %p151 = scmp.lt.s32.totalorder %s11, 5
      %p152 = pnand %p150, %p151
      %p153 = pneg %p152
      // Predicated region
      $region25: #{tpu_custom_call.1} parent=5 // pred_check
        _
      $region26: #{tpu_custom_call.1} parent=5 // pred_check_branch
        %155 = sbr.rel (%p152) target = $region28
      $region27: #{tpu_custom_call.1} parent=5 // pred_region
        %s156 = ssub.s32 %s11, 1
        %s157 = sand.u32 %s38, 1
        %s158 = scalar_lea.sflag [#allocation6], %s157
        %s159 = sand.u32 %s38, 1
        %s160 = smul.addr %s159, 16
        %s161 = scalar_lea.vmem [#allocation5], %s160
        // Predicated region
        $region29: #{tpu_custom_call.1} parent=27 // pred_check
          %p162 = pneg %p51
        $region30: #{tpu_custom_call.1} parent=27 // pred_check_branch
          %164 = sbr.rel (%p162) target = $region32
        $region31: #{tpu_custom_call.1} parent=27 // pred_region
          %165 = dma.done %s158, 256
        $region32: #{tpu_custom_call.1} parent=27 // pred_fallthru
          _
        %s166 = sand.u32 %s38, 1
        %s167 = scalar_lea.sflag [#allocation6], %s166
        %s168 = sand.u32 %s38, 1
        %s169 = smul.addr %s168, 16
        %s170 = scalar_lea.vmem [#allocation5], %s169
        %p171 = pneg %p51
        %p172 = pneg %p48
        %p173 = scmp.lt.s32.totalorder %s20, 0
        %s174 = scalar_select %p173, %s20, 0
        %s175 = smul.addr %s174, 8
        %s176 = scalar_lea.vmem %s1, %s175
        %p177 = pneg %p77
        %p178 = pneg %p74
        %p179 = pneg %p103
        %p180 = pneg %p100
        %p181 = scmp.lt.s32.totalorder %s20, 0
        %s182 = scalar_select %p181, %s20, 0
        %s183 = smul.addr %s182, 8
        %s184 = scalar_lea.vmem %s2, %s183
        %s185 = smul.u32 2, %s21
        %p186 = scmp.lt.s32.totalorder %s20, 0
        %s187 = scalar_select %p186, %s20, 0
        %s188 = smul.addr %s187, 8
        %s189 = scalar_lea.vmem %s1, %s188
        %p190 = scmp.lt.s32.totalorder %s20, 0
        %s191 = scalar_select %p190, %s20, 0
        %s192 = smul.addr %s191, 8
        %s193 = scalar_lea.vmem %s2, %s192
        %p194 = scmp.eq.s32.totalorder %s21, 0
        // Predicated region
        $region33: #{tpu_custom_call.1} parent=27 // pred_check
          %p195 = pneg %p194
        $region34: #{tpu_custom_call.1} parent=27 // pred_check_branch
          %197 = sbr.rel (%p195) target = $region36
        $region35: #{tpu_custom_call.1} parent=27 // pred_region
          %vm198 = vcmask 7168
          %199 = vst.msk [vmem:[#allocation2] sm:$0xff] %vm198, -1e+30
          %200 = vst.msk [vmem:[#allocation3] sm:$0xff] %vm198, 0.0
          %201 = vst.msk [vmem:[#allocation4] sm:$0xff] %vm198, 0.0
        $region36: #{tpu_custom_call.1} parent=27 // pred_fallthru
          _
        %v202 = vld [vmem:[%s161] sm:$0xff]
        %v203 = vld [vmem:[%s161 + $0x8] sm:$0xff]
        %v204 = vld [vmem:[%s189] sm:$0xff]
        %v205 = vlaneseq
        %v206 = vand.u32 %v205, 127
        %v207 = vadd.s32 %v206, 128
        %s208 = smul.u32 %s21, 256
        %v209 = vstv %s208
        %v210 = vadd.s32 %v206, %v209
        %v211 = vadd.s32 %v207, %v209
        %vm212 = vcmp.lt.s32.totalorder %v210, 1000
        %vm213 = vcmp.lt.s32.totalorder %v211, 1000
        %214 = vset.pattern.permute.xlu0 0
        %215 = vperm.xlu0 %214, %v204
        %v216 = vpop.permute.xlu0 %215
        %vm217 = vcmp.eq.s32.totalorder %v210, %v216
        %vm218 = vcmp.eq.s32.totalorder %v211, %v216
        %v219 = vmul.f32 %v202, 64.0
        %v220 = vmul.f32 %v203, 64.0
        %v221 = vsub.f32 %v219, 25.6
        %v222 = vsub.f32 %v220, 25.6
        %v223 = vsel %vm217, %v221, %v219
        %v224 = vsel %vm218, %v222, %v220
        %v225 = vsel %vm212, 1, 0
        %v226 = vsel %vm213, 1, 0
        %vm227 = vcmp.eq.s32.totalorder %v225, 1
        %vm228 = vcmp.eq.s32.totalorder %v226, 1
        %v229 = vsel %vm227, %v223, -1e+30
        %v230 = vsel %vm228, %v224, -1e+30
        %v231 = vld [vmem:[#allocation2] sm:$0xff]
        %v232 = vmax.f32 %v229, %v230
        %233 = vmax.xlane.f32.xlu0 %v232
        %v234 = vpop.xlane.xlu0 %233
        %v235 = vmax.f32 %v231, %v234
        %v236 = vsub.f32 %v231, %v235
        %v237 = vmul.f32 %v236, 1.442695
        %v238 = vpow.pop %v237
        %240 = vset.pattern.permute.xlu0 0
        %241 = vperm.xlu0 %240, %v235
        %v242 = vpop.permute.xlu0 %241
        %v244 = vsub.f32 %v229, %v242
        %v245 = vsub.f32 %v230, %v242
        %v246 = vmul.f32 %v244, 1.442695
        %v247 = vpow.pop %v246
        %v248 = vmul.f32 %v245, 1.442695
        %v249 = vpow.pop %v248
        %v250 = vld [vmem:[#allocation3] sm:$0xff]
        %v251 = vmul.f32 %v238, %v250
        %v252 = vadd.f32 %v247, %v249
        %253 = vadd.xlane.f32.xlu0 %v252
        %v254 = vpop.xlane.xlu0 %253
        %v255 = vadd.f32 %v251, %v254
        %vm256 = vcmask 7168
        %257 = vst.msk [vmem:[#allocation3] sm:$0xff] %vm256, %v255
        %258 = vst.msk [vmem:[#allocation2] sm:$0xff] %vm256, %v235
        %v259 = vld [vmem:[#allocation4] sm:$0xff]
        %v260 = vsel %vm217, %v229, 0.0
        %v261 = vsel %vm218, %v230, 0.0
        %v262 = vadd.f32 %v260, %v261
        %263 = vadd.xlane.f32.xlu0 %v262
        %v264 = vpop.xlane.xlu0 %263
        %v265 = vadd.f32 %v259, %v264
        %266 = vst.msk [vmem:[#allocation4] sm:$0xff] %vm256, %v265
        %p267 = scmp.eq.s32.totalorder %s21, 3
        // Predicated region
        $region37: #{tpu_custom_call.1} parent=27 // pred_check
          %p268 = pneg %p267
        $region38: #{tpu_custom_call.1} parent=27 // pred_check_branch
          %270 = sbr.rel (%p268) target = $region40
        $region39: #{tpu_custom_call.1} parent=27 // pred_region
          %v271 = vld [vmem:[#allocation2] sm:$0xff]
          %v272 = vld [vmem:[#allocation3] sm:$0xff]
          %v273 = vlog2.pop %v272
          %v274 = vmul.f32 %v273, 0.6931472
          %v275 = vadd.f32 %v271, %v274
          %v276 = vld [vmem:[#allocation4] sm:$0xff]
          %v277 = vsub.f32 %v275, %v276
          %278 = vst.msk [vmem:[%s193] sm:$0xff] %vm256, %v277
        $region40: #{tpu_custom_call.1} parent=27 // pred_fallthru
          _
        %p279 = scmp.lt.s32.totalorder %s20, 0
        %s280 = scalar_select %p279, %s20, 0
        %s281 = smul.addr %s280, 8
        %s282 = scalar_lea.vmem %s2, %s281
        // Predicated region
        $region41: #{tpu_custom_call.1} parent=27 // pred_check
          %p283 = pneg %p100
        $region42: #{tpu_custom_call.1} parent=27 // pred_check_branch
          %285 = sbr.rel (%p283) target = $region44
        $region43: #{tpu_custom_call.1} parent=27 // pred_region
          _
        $region44: #{tpu_custom_call.1} parent=27 // pred_fallthru
          _
        // Predicated region
        $region45: #{tpu_custom_call.1} parent=27 // pred_check
          %p286 = pneg %p100
        $region46: #{tpu_custom_call.1} parent=27 // pred_check_branch
          %288 = sbr.rel (%p286) target = $region48
        $region47: #{tpu_custom_call.1} parent=27 // pred_region
          %p289 = scmp.lt.s32.totalorder %s20, 0
          %s290 = scalar_select %p289, %s20, 0
          %s291 = smul.addr %s290, 8
          %s292 = scalar_lea.vmem %s2, %s291
        $region48: #{tpu_custom_call.1} parent=27 // pred_fallthru
          _
      $region28: #{tpu_custom_call.1} parent=5 // pred_fallthru
        _
      %p293 = scmp.le.s32.totalorder 2, %s11
      // Predicated region
      $region49: #{tpu_custom_call.1} parent=5 // pred_check
        %p294 = pneg %p293
      $region50: #{tpu_custom_call.1} parent=5 // pred_check_branch
        %296 = sbr.rel (%p294) target = $region52
      $region51: #{tpu_custom_call.1} parent=5 // pred_region
        %s297 = ssub.s32 %s11, 2
      $region52: #{tpu_custom_call.1} parent=5 // pred_fallthru
        _
    $region6: #{tpu_custom_call.1} parent=1 // loop_footer
      %s15 = sadd.s32 1, %s11
    $region7: #{tpu_custom_call.1} parent=1 // loop_footer_branch
      %10 = sbr.rel target = $region3
    $region8: #{tpu_custom_call.1} parent=1 // loop_exit
      _
    %298 = vsyncpa [#allocation6], 1
    %s299 = scalar_lea.sflag [#allocation6], 1
    %300 = vsyncpa %s299, 1

</llo_original>
